<compile_context>
chip_gen: v7x
topology: tpu7x:2x2x1
jax: 0.10.0
libtpu: 0.0.40
codegen_flags: <defaults>
</compile_context>

<pallas_src>
import functools

import jax
import jax.numpy as jnp
from jax.experimental import pallas as pl
from jax.experimental.pallas import tpu as pltpu

_MIB = 1024 * 1024


# ---------------------------------------------------------------------------
# Kernels
# ---------------------------------------------------------------------------
def _rmsnorm_kernel(x_ref, w_ref, o_ref, *, inv_h, eps):
    # fp32 compute; reduce over the lane (last) dim.
    x = x_ref[...].astype(jnp.float32)
    ssq = jnp.sum(x * x, axis=-1, keepdims=True)     # cross-lane reduce -> XLU
    inv = jax.lax.rsqrt(ssq * inv_h + eps)           # rsqrt -> EUP (free slot)
    o_ref[...] = (x * inv * w_ref[...]).astype(o_ref.dtype)


def _rmsnorm_packed_kernel(x_ref, w_ref, o_ref, *, inv_h, eps, seg):
    # x_ref is (tile, k*seg) where k*seg == 128: k original rows are packed
    # along the lane dim so loads/stores stay lane-dense.  Each seg-wide
    # lane group is an independent RMSNorm row.
    x = x_ref[...].astype(jnp.float32)
    kh = x.shape[-1]
    # Block-diagonal segment matrix S[i, j] = 1 iff lanes i, j share a segment.
    r = jax.lax.broadcasted_iota(jnp.int32, (kh, kh), 0) // seg
    c = jax.lax.broadcasted_iota(jnp.int32, (kh, kh), 1) // seg
    seg_mat = (r == c).astype(jnp.float32)
    # Per-lane segment sum of squares via one tiny MXU matmul (MXU is idle in
    # this kernel); avoids in-kernel reshapes and masked narrow stores.
    ssq = jnp.dot(x * x, seg_mat, preferred_element_type=jnp.float32)
    inv = jax.lax.rsqrt(ssq * inv_h + eps)
    o_ref[...] = (x * inv * w_ref[...]).astype(o_ref.dtype)


# ---------------------------------------------------------------------------
# Tiling plan
# ---------------------------------------------------------------------------
def _round_down(x, m):
    return (x // m) * m


def _chip_plan():
    """Generation-aware sizing derived from VMEM capacity.

    Returns (block_budget_bytes, vmem_limit_bytes, per_step_byte_target,
             min_grid_steps, num_cores_hint).
    """
    try:
        info = pltpu.get_tpu_info()
        vmem = int(getattr(info, "vmem_capacity_bytes", 64 * _MIB))
    except Exception:
        vmem = 64 * _MIB  # conservative fallback
    if vmem <= 64 * _MIB:
        # v7x-like: 64 MiB VMEM, ~3.2 TB/s HBM, 2 TensorCores per chip.
        limit = vmem - 16 * _MIB           # ~48 MiB
        byte_target = 8 * _MIB             # per-step (in + out) HBM traffic
        min_grid_steps = 8
        num_cores = 2
    else:
        # v5e / v6e: 128 MiB VMEM, 0.8-1.4 TB/s HBM, 1 TensorCore.
        limit = vmem - 16 * _MIB           # ~112 MiB
        byte_target = 4 * _MIB
        min_grid_steps = 4
        num_cores = 1
    budget = max(4 * _MIB, limit - 8 * _MIB)
    return budget, limit, byte_target, min_grid_steps, num_cores


def _pick_row_tile(rows, H, dtype, budget, byte_target, min_grid_steps,
                   num_cores):
    itemsize = jnp.dtype(dtype).itemsize
    # bf16 packs 2 rows/sublane, 1-byte dtypes 4: keep stores full-width.
    align = {1: 32, 2: 16}.get(itemsize, 8)
    # Live f32 intermediates: one upcast tile for sub-fp32 inputs (~8 B/elem
    # incl. streaming temps), ~4 B/elem for fp32 inputs.
    inter = 8 if itemsize < 4 else 4
    per_row_vmem = max(1, H * (4 * itemsize + inter))   # dbl-buffered in+out
    per_row_traffic = max(1, 2 * H * itemsize)          # HBM in + out per row

    tile_cap = max(align, budget // per_row_vmem)               # VMEM ceiling
    tile_floor = max(align, pl.cdiv(byte_target, per_row_traffic))  # HBM floor

    rows_aligned = pl.cdiv(rows, align) * align

    if rows_aligned <= tile_cap:
        # Whole tensor fits one budgeted block: single step, no shrink.
        tile = rows_aligned
    else:
        tile = tile_cap
        # Keep several steps for pipelining / 2-TC sharding, but never shrink
        # below the byte-target floor (per-step time must dwarf ~0.35 us
        # fixed grid-step overhead).
        cap_for_steps = rows // min_grid_steps
        if cap_for_steps >= tile_floor:
            tile = min(tile, cap_for_steps)

    tile = max(align, _round_down(tile, align))
    tile = min(tile, rows_aligned)

    # On 2-TC chips keep the step count even so neither core idles a step.
    if num_cores >= 2:
        g = pl.cdiv(rows, tile)
        if g > 1 and g % 2 == 1:
            t2 = pl.cdiv(rows, g + 1)
            t2 = max(align, pl.cdiv(t2, align) * align)
            if t2 <= tile_cap and pl.cdiv(rows, t2) % 2 == 0:
                tile = t2

    return int(tile)


# ---------------------------------------------------------------------------
# Wrapper
# ---------------------------------------------------------------------------
def custom_rms_norm(hidden_states, weight=None, eps=1e-6, *, row_tile=None):
    """Pallas TPU implementation of CustomRMSNorm.forward.

    hidden_states: (..., H) array of any float dtype.
    weight:        (H,) scale (defaults to ones, as in the PyTorch module).
    Returns an array with the same shape and dtype as hidden_states.
    """
    orig_shape = hidden_states.shape
    orig_dtype = hidden_states.dtype
    H = orig_shape[-1]
    rows = 1
    for d in orig_shape[:-1]:
        rows *= d

    if weight is None:
        weight = jnp.ones((H,), dtype=jnp.float32)

    if rows == 0 or H == 0:
        return hidden_states

    budget, vmem_limit, byte_target, min_steps, num_cores = _chip_plan()

    # Narrow-H fast path: fold k = 128//H rows into the lane dim so the
    # input/output slabs are 128-lane dense (unmasked vst, wide DMAs).
    # The (rows, H) -> (rows//k, k*H) merge of row-major trailing dims is a
    # metadata-only reshape at the HBM level.
    pack = 1
    if H < 128 and 128 % H == 0:
        k = 128 // H
        if rows % k == 0:
            pack = k
    # TODO(synk): H > 128 with H % 128 != 0 still pays masked partial stores;
    # an lcm-based lane packing could cover that case too.

    x2d = hidden_states.reshape(rows // pack, pack * H)
    w2d = weight.astype(jnp.float32).reshape(1, H)
    if pack > 1:
        w2d = jnp.tile(w2d, (1, pack))            # (1, 128)

    p_rows, p_h = x2d.shape

    if row_tile is None:
        row_tile = _pick_row_tile(p_rows, p_h, orig_dtype, budget,
                                  byte_target, min_steps, num_cores)

    if pack > 1:
        kernel = functools.partial(_rmsnorm_packed_kernel,
                                   inv_h=1.0 / H, eps=float(eps), seg=H)
    else:
        kernel = functools.partial(_rmsnorm_kernel,
                                   inv_h=1.0 / H, eps=float(eps))

    # cdiv grid: ragged last block is padded by Pallas; compute is per-row so
    # padded rows are harmless and discarded.
    grid = (pl.cdiv(p_rows, row_tile),)

    out2d = pl.pallas_call(
        kernel,
        out_shape=jax.ShapeDtypeStruct((p_rows, p_h), orig_dtype),
        grid_spec=pltpu.PrefetchScalarGridSpec(
            num_scalar_prefetch=0,
            grid=grid,
            in_specs=[
                pl.BlockSpec((row_tile, p_h), lambda i: (i, 0)),
                pl.BlockSpec((1, p_h), lambda i: (0, 0)),  # constant block:
                # Pallas skips the re-fetch when the block index repeats.
            ],
            out_specs=pl.BlockSpec((row_tile, p_h), lambda i: (i, 0)),
        ),
        compiler_params=pltpu.CompilerParams(
            dimension_semantics=("parallel",),
            vmem_limit_bytes=int(vmem_limit),
        ),
    )(x2d, w2d)

    return out2d.reshape(orig_shape)


# ---------------------------------------------------------------------------
# Reference + tests
# ---------------------------------------------------------------------------
def _ref_rmsnorm(x, w, eps):
    xf = x.astype(jnp.float32)
    inv = jax.lax.rsqrt(jnp.mean(xf * xf, axis=-1, keepdims=True) + eps)
    return (xf * inv * w.astype(jnp.float32)).astype(x.dtype)


if __name__ == "__main__":
    eps = 1e-6
    key = jax.random.PRNGKey(0)
    k1, k2, k3 = jax.random.split(key, 3)

    # Case 1: lane-dense bf16 (batch=2, seq=8, hidden=128), standard path.
    B, S, H = 2, 8, 128
    x = jax.random.normal(k1, (B, S, H), dtype=jnp.float32).astype(jnp.bfloat16)
    w = jnp.ones((H,), dtype=jnp.float32)       # nn.Parameter(ones(hidden_size))
    out = jax.block_until_ready(custom_rms_norm(x, w, eps))
    ref = _ref_rmsnorm(x, w, eps)
    assert out.shape == x.shape and out.dtype == x.dtype
    assert jnp.allclose(out.astype(jnp.float32), ref.astype(jnp.float32),
                        atol=2e-2, rtol=2e-2)

    # Case 2: ragged row count + narrow hidden dim, fp32 (standard path,
    # rows not divisible by the pack factor).
    B2, S2, H2 = 2, 7, 32
    x2 = jax.random.normal(k2, (B2, S2, H2), dtype=jnp.float32)
    w2 = jnp.full((H2,), 1.5, dtype=jnp.float32)
    out2 = jax.block_until_ready(custom_rms_norm(x2, w2, eps))
    ref2 = _ref_rmsnorm(x2, w2, eps)
    assert out2.shape == x2.shape and out2.dtype == x2.dtype
    assert jnp.allclose(out2, ref2, atol=1e-5, rtol=1e-5)

    # Case 3: narrow hidden dim with rows divisible by 128//H -> lane-packed
    # fast path (bf16).
    B3, S3, H3 = 8, 8, 32
    x3 = jax.random.normal(k3, (B3, S3, H3), dtype=jnp.float32).astype(jnp.bfloat16)
    w3 = jnp.linspace(0.5, 1.5, H3, dtype=jnp.float32)
    out3 = jax.block_until_ready(custom_rms_norm(x3, w3, eps))
    ref3 = _ref_rmsnorm(x3, w3, eps)
    assert out3.shape == x3.shape and out3.dtype == x3.dtype
    assert jnp.allclose(out3.astype(jnp.float32), ref3.astype(jnp.float32),
                        atol=2e-2, rtol=2e-2)

    # Default-weight path (weight=None -> ones), like the module with
    # hidden_size=None.
    out4 = jax.block_until_ready(custom_rms_norm(x, None, eps))
    ref4 = _ref_rmsnorm(x, jnp.ones((H,), jnp.float32), eps)
    assert jnp.allclose(out4.astype(jnp.float32), ref4.astype(jnp.float32),
                        atol=2e-2, rtol=2e-2)

    print("KERNEL_OK")
</pallas_src>

<mosaic_0001>
module attributes {stable_mosaic.version = 11 : i64} {
  func.func @_rmsnorm_kernel(%arg0: i32, %arg1: memref<16x128xbf16, #tpu.memory_space<vmem>>, %arg2: memref<1x128xf32, #tpu.memory_space<vmem>>, %arg3: memref<16x128xbf16, #tpu.memory_space<vmem>>) attributes {dimension_semantics = [#tpu.dimension_semantics<parallel>], iteration_bounds = array<i64: 1>, scalar_prefetch = 0 : i64, scratch_operands = 0 : i64, tpu.core_type = #tpu.core_type<tc>, window_params = [{transform_indices = @transform_0, window_bounds = array<i64: 16, 128>}, {pipeline_mode = #tpu.pipeline_mode<synchronous>, transform_indices = @transform_1, window_bounds = array<i64: 1, 128>}, {transform_indices = @transform_2, window_bounds = array<i64: 16, 128>}]} {
    %c0 = arith.constant 0 : index
    %c0_0 = arith.constant 0 : index
    %0 = vector.load %arg1[%c0, %c0_0] : memref<16x128xbf16, #tpu.memory_space<vmem>>, vector<16x128xbf16>
    %1 = arith.extf %0 : vector<16x128xbf16> to vector<16x128xf32>
    %2 = arith.mulf %1, %1 : vector<16x128xf32>
    %cst = arith.constant dense<0.000000e+00> : vector<16xf32>
    %3 = vector.multi_reduction <add>, %2, %cst [1] : vector<16x128xf32> to vector<16xf32>
    %4 = vector.shape_cast %3 : vector<16xf32> to vector<16x1xf32>
    %cst_1 = arith.constant 7.812500e-03 : f32
    %5 = vector.broadcast %cst_1 : f32 to vector<16x1xf32>
    %6 = arith.mulf %4, %5 : vector<16x1xf32>
    %cst_2 = arith.constant 9.99999997E-7 : f32
    %7 = vector.broadcast %cst_2 : f32 to vector<16x1xf32>
    %8 = arith.addf %6, %7 : vector<16x1xf32>
    %9 = math.rsqrt %8 : vector<16x1xf32>
    %10 = vector.broadcast %9 : vector<16x1xf32> to vector<16x128xf32>
    %11 = arith.mulf %1, %10 : vector<16x128xf32>
    %c0_3 = arith.constant 0 : index
    %c0_4 = arith.constant 0 : index
    %12 = vector.load %arg2[%c0_3, %c0_4] : memref<1x128xf32, #tpu.memory_space<vmem>>, vector<1x128xf32>
    %13 = vector.broadcast %12 : vector<1x128xf32> to vector<16x128xf32>
    %14 = arith.mulf %11, %13 : vector<16x128xf32>
    %15 = arith.truncf %14 : vector<16x128xf32> to vector<16x128xbf16>
    %c0_5 = arith.constant 0 : index
    %c0_6 = arith.constant 0 : index
    %16 = vector.load %arg3[%c0_5, %c0_6] : memref<16x128xbf16, #tpu.memory_space<vmem>>, vector<16x128xbf16>
    tpu.vector_store %arg3[%c0_5, %c0_6], %15 {strides = array<i32>} : memref<16x128xbf16, #tpu.memory_space<vmem>>, vector<16x128xbf16>,
    return
  }
  func.func @transform_0(%arg0: i32) -> (i32, i32) {
    %c0_i32 = arith.constant 0 : i32
    %c0_i32_0 = arith.constant 0 : i32
    return %arg0, %c0_i32 : i32, i32
  }
  func.func @transform_1(%arg0: i32) -> (i32, i32) {
    %c0_i32 = arith.constant 0 : i32
    %c0_i32_0 = arith.constant 0 : i32
    %c0_i32_1 = arith.constant 0 : i32
    return %c0_i32, %c0_i32_0 : i32, i32
  }
  func.func @transform_2(%arg0: i32) -> (i32, i32) {
    %c0_i32 = arith.constant 0 : i32
    %c0_i32_0 = arith.constant 0 : i32
    return %arg0, %c0_i32 : i32, i32
  }
}

</mosaic_0001>

<llo_original>
// kernel: tpu_custom_call.1
$region0: #{tpu_custom_call.1}
  #allocation0 [shape = 'u32[]', space=smem, size = 0x4, offset = 0x4, fixed_abs, tag = 'smem constant byte address 0x4 - core index']
  #allocation1 [shape = 'u32[144,128]{1,0:T(1,128)}', space=vmem, size = 0x12000, scoped, tag = 'internal scratch']
  %s0 = inlined_call_operand.hbm [shape: bf16[16,128], index: 0, kind: input, shape index: {}]
  %s1 = inlined_call_operand.vmem [shape: f32[1,128], index: 1, kind: input, shape index: {}]
  %s2 = inlined_call_operand.hbm [shape: bf16[16,128], index: 2, kind: output, shape index: {}]
  %s3 = sld [smem:[#allocation0]]
  $region22: #{tpu_custom_call.1} parent=0
    _
  %s5 = ssub.s32 1, %s3
  %s6 = scalar_select 0, %s5, %s3
  $region1: #{tpu_custom_call.1} parent=0
    #allocation2 [shape = 'u8[4096]{0}', space=vmem, size = 0x1000, scoped, tag = 'input window, operand 0, single buffered']
    #allocation3 [shape = 's32[1]{0}', space=sflag, size = 0x4, scoped, tag = 'scoped memory for tpu_custom_call.1']
    #allocation4 [shape = 's32[1]{0}', space=sflag, size = 0x4, scoped, tag = 'scoped memory for tpu_custom_call.1']
    #allocation5 [shape = 'u8[4096]{0}', space=vmem, size = 0x1000, scoped, tag = 'output window, operand 0, single buffered']
    %7 = vsyncpa [#allocation3], 0
    %8 = vsyncpa [#allocation4], 0
    // Predicated region
    $region2: #{tpu_custom_call.1} parent=1 // pred_check
      _
    $region3: #{tpu_custom_call.1} parent=1 // pred_check_branch
      %10 = sbr.rel (0) target = $region5
    $region4: #{tpu_custom_call.1} parent=1 // pred_region
      %s12 = ssub.s32 128, 128
      %13 = vsyncadd [#allocation3], %s12
      %s14 = sshll.u32 [#allocation2], 4
      %s15 = int_to_ptr.vmem [resolvable:$true] %s14
      %20 = dma.hbm_to_vmem [thread:$0]  %s0, 128, %s15, [#allocation3], 64, 64, 4
    $region5: #{tpu_custom_call.1} parent=1 // pred_fallthru
      _
    // Predicated region
    $region6: #{tpu_custom_call.1} parent=1 // pred_check
      _
    $region7: #{tpu_custom_call.1} parent=1 // pred_check_branch
      %22 = sbr.rel (0) target = $region9
    $region8: #{tpu_custom_call.1} parent=1 // pred_region
      _
    $region9: #{tpu_custom_call.1} parent=1 // pred_fallthru
      _
    // Predicated region
    $region10: #{tpu_custom_call.1} parent=1 // pred_check
      _
    $region11: #{tpu_custom_call.1} parent=1 // pred_check_branch
      %24 = sbr.rel (0) target = $region13
    $region12: #{tpu_custom_call.1} parent=1 // pred_region
      %25 = dma.done [#allocation3], 128
    $region13: #{tpu_custom_call.1} parent=1 // pred_fallthru
      _
    %v26 = vld [vmem:[#allocation2] sm:$0xf]
    %v27 = vld [vmem:[#allocation2 + $0x4] sm:$0xf]
    %v28 = vunpack.c.l.bf16 %v26
    %v29 = vunpack.c.l.bf16 %v27
    %v30 = vmul.f32 %v28, %v28
    %v31 = vmul.f32 %v29, %v29
    %32 = vadd.xlane.f32.xlu0 %v30
    %v33 = vpop.xlane.xlu0 %32
    %34 = vadd.xlane.f32.xlu0 %v31
    %v35 = vpop.xlane.xlu0 %34
    %v36 = vmul.f32 %v33, 0.0078125
    %v37 = vmul.f32 %v35, 0.0078125
    %v38 = vadd.f32 %v36, 1e-06
    %v39 = vadd.f32 %v37, 1e-06
    %v40 = vrsqrt.pop %v38
    %v41 = vrsqrt.pop %v39
    %v42 = vmul.f32 %v28, %v40
    %v43 = vmul.f32 %v29, %v41
    %v44 = vld [vmem:[%s1] sm:$0x1]
    %v46 = vlaneseq
    %v47 = vshrl.u32 %v46, 7
    %v48 = vsub.s32 0, %v47
    %v49 = vrot.slane %v44, %v48
    %v51 = vmul.f32 %v42, %v49
    %v52 = vmul.f32 %v43, %v49
    %v53 = vpack.c.bf16 %v52, %v51
    %v55 = vunpack.c.l.b16 %v53
    %v56 = vunpack.c.h.b16 %v53
    %v57 = vpack.c.b16 %v55, %v55
    %v58 = vpack.c.b16 %v56, %v56
    %61 = vst [vmem:[#allocation5] sm:$0xf] %v57
    %62 = vst [vmem:[#allocation5 + $0x4] sm:$0xf] %v58
    // Predicated region
    $region14: #{tpu_custom_call.1} parent=1 // pred_check
      _
    $region15: #{tpu_custom_call.1} parent=1 // pred_check_branch
      %64 = sbr.rel (0) target = $region17
    $region16: #{tpu_custom_call.1} parent=1 // pred_region
      %s66 = ssub.s32 128, 128
      %67 = vsyncadd [#allocation4], %s66
      %s68 = sshll.u32 [#allocation5], 4
      %s69 = int_to_ptr.vmem [resolvable:$true] %s68
      %74 = dma.vmem_to_hbm [thread:$0]  %s69, 128, %s2, [#allocation4], 64, 64, 4
    $region17: #{tpu_custom_call.1} parent=1 // pred_fallthru
      _
    // Predicated region
    $region18: #{tpu_custom_call.1} parent=1 // pred_check
      _
    $region19: #{tpu_custom_call.1} parent=1 // pred_check_branch
      %76 = sbr.rel (0) target = $region21
    $region20: #{tpu_custom_call.1} parent=1 // pred_region
      %77 = dma.done [#allocation4], 128
    $region21: #{tpu_custom_call.1} parent=1 // pred_fallthru
      _
    %78 = vsyncpa [#allocation3], 1
    %79 = vsyncpa [#allocation4], 1

</llo_original>
